<compile_context>
chip_gen: v5e
topology: v5e:2x2
jax: 0.10.0
libtpu: 0.0.40
codegen_flags: <defaults>
</compile_context>

<pallas_src>
import math
from functools import partial

import jax
import jax.numpy as jnp
from jax.experimental import pallas as pl
from jax.experimental.pallas import tpu as pltpu


def _mha_out(qk_src, v_src, wo, bo, *, heads, d_head, d_val_head, k_off, v_off):
    """Per-head softmax attention + distributed output projection.

    qk_src: (L, >=k_off+heads*d_head) f32, q at lane offset 0, k at k_off.
    v_src:  (L, >=v_off+heads*d_val_head) f32, projected values at v_off.
    wo:     (heads*d_val_head, C_val) f32 (Wo^T).
    bo:     (1, C_val) f32.
    """
    L = qk_src.shape[0]
    c_val = wo.shape[1]
    out = jnp.broadcast_to(bo, (L, c_val)).astype(jnp.float32)

    # heads is small & static -> unrolled at trace time.
    for h in range(heads):
        qh = qk_src[:, h * d_head:(h + 1) * d_head]                       # (L, D)
        kh = qk_src[:, k_off + h * d_head: k_off + (h + 1) * d_head]      # (L, D)
        vh = v_src[:, v_off + h * d_val_head: v_off + (h + 1) * d_val_head]  # (L, Dv)

        s = jnp.einsum("qd,kd->qk", qh, kh,
                       preferred_element_type=jnp.float32)                # (L, L)
        m = jnp.max(s, axis=-1, keepdims=True)
        e = jnp.exp(s - m)
        inv = 1.0 / jnp.sum(e, axis=-1, keepdims=True)                    # (L, 1)

        # Deferred normalization: scale after the (much narrower) PV matmul.
        oh = jnp.dot(e, vh, preferred_element_type=jnp.float32) * inv     # (L, Dv)

        # Distribute the output projection over heads (sublane-aligned slices
        # of Wo^T) instead of concatenating heads on the lane axis.
        out = out + jnp.dot(oh, wo[h * d_val_head:(h + 1) * d_val_head, :],
                            preferred_element_type=jnp.float32)
    return out


def qkv_self_kernel(enc_ref, wqkv_ref, b_ref, wo_ref, out_ref, *, heads, d_head, c_enc):
    # enc_ref: (1, L, C)   wqkv_ref: (C, 3C)   b_ref: (2, 3C)   wo_ref: (C, C)
    enc = enc_ref[0]                                                      # (L, C)
    # Single fused Q|K|V projection (scale folded into the Q third, bk == 0).
    qkv = jnp.dot(enc, wqkv_ref[...],
                  preferred_element_type=jnp.float32) + b_ref[0:1, :]     # (L, 3C)
    out = _mha_out(qkv, qkv, wo_ref[...], b_ref[1:2, 0:c_enc],
                   heads=heads, d_head=d_head, d_val_head=d_head,
                   k_off=c_enc, v_off=2 * c_enc)
    out_ref[0] = out.astype(out_ref.dtype)


def qkv_cross_kernel(enc_ref, val_ref, wqk_ref, bqk_ref, wvo_ref, bvo_ref, out_ref,
                     *, heads, d_head, d_val_head, c_enc, c_val):
    # enc_ref: (1, L, C_enc)  val_ref: (1, L, C_val)
    # wqk_ref: (C_enc, 2C_enc)  bqk_ref: (1, 2C_enc)
    # wvo_ref: (2C_val, C_val) = [Wv^T ; Wo^T]  bvo_ref: (2, C_val) = [bv ; bo]
    enc = enc_ref[0]
    val = val_ref[0]                                # already pooled to L_enc rows

    qk = jnp.dot(enc, wqk_ref[...],
                 preferred_element_type=jnp.float32) + bqk_ref[...]       # (L, 2C_enc)
    v = jnp.dot(val, wvo_ref[0:c_val, :],
                preferred_element_type=jnp.float32) + bvo_ref[0:1, :]     # (L, C_val)

    out = _mha_out(qk, v, wvo_ref[c_val:2 * c_val, :], bvo_ref[1:2, :],
                   heads=heads, d_head=d_head, d_val_head=d_val_head,
                   k_off=c_enc, v_off=0)
    out_ref[0] = out.astype(out_ref.dtype)


def _adaptive_avg_pool_matrix(l_out, l_in, dtype=jnp.float32):
    """Exact PyTorch adaptive_avg_pool windowing as an (l_out, l_in) matrix."""
    rows = []
    for i in range(l_out):
        start = (i * l_in) // l_out
        end = -((-(i + 1) * l_in) // l_out)          # ceil((i+1)*l_in/l_out)
        row = jnp.zeros((l_in,), dtype).at[start:end].set(1.0 / (end - start))
        rows.append(row)
    return jnp.stack(rows, axis=0)


def qkv_attention(pe_lin_encoding, pe_lin_skip, params, heads):
    """pe_lin_encoding: (B, C_enc, L_enc); pe_lin_skip: (B, C_skip, L_skip) or None."""
    B, C_enc, L_enc = pe_lin_encoding.shape
    assert C_enc % heads == 0
    # TODO(synk): the PyTorch divide_by_heads zero-pad branch (channels % heads
    # != 0) is not implemented; divisibility is required instead.
    d_head = C_enc // heads
    scale = 1.0 / math.sqrt(d_head)

    enc_t = jnp.transpose(pe_lin_encoding, (0, 2, 1))            # (B, L_enc, C_enc)

    wq_t = params["wq"].T * scale
    bq_s = params["bq"] * scale
    bk_z = jnp.zeros_like(params["bk"])     # bk is row-constant in the scores -> cancels in softmax
    wk_t = params["wk"].T
    wv_t = params["wv"].T
    wo_t = params["wo"].T
    bv, bo = params["bv"], params["bo"]

    cp = pltpu.CompilerParams(dimension_semantics=("parallel",))

    if pe_lin_skip is None:
        # ---- self-attention path: fused Q|K|V matmul, single activation DMA ----
        C_val = C_enc
        wqkv = jnp.concatenate([wq_t, wk_t, wv_t], axis=1)                  # (C, 3C)
        b_row0 = jnp.concatenate([bq_s, bk_z, bv])                          # (3C,)
        b_row1 = jnp.concatenate([bo, jnp.zeros((2 * C_enc,), bo.dtype)])   # (3C,)
        b2 = jnp.stack([b_row0, b_row1], axis=0)                            # (2, 3C)

        kernel = partial(qkv_self_kernel, heads=heads, d_head=d_head, c_enc=C_enc)
        grid_spec = pltpu.PrefetchScalarGridSpec(
            num_scalar_prefetch=0,
            grid=(B,),
            in_specs=[
                pl.BlockSpec((1, L_enc, C_enc), lambda b: (b, 0, 0)),
                pl.BlockSpec((C_enc, 3 * C_enc), lambda b: (0, 0)),
                pl.BlockSpec((2, 3 * C_enc), lambda b: (0, 0)),
                pl.BlockSpec((C_enc, C_enc), lambda b: (0, 0)),
            ],
            out_specs=pl.BlockSpec((1, L_enc, C_val), lambda b: (b, 0, 0)),
        )
        out_t = pl.pallas_call(
            kernel,
            out_shape=jax.ShapeDtypeStruct((B, L_enc, C_val), jnp.float32),
            grid_spec=grid_spec,
            compiler_params=cp,
        )(enc_t, wqkv, b2, wo_t)
    else:
        # ---- cross (skip) path ----
        val_t = jnp.transpose(pe_lin_skip, (0, 2, 1))            # (B, L_skip, C_skip)
        L_val, C_val = val_t.shape[1], val_t.shape[2]
        assert C_val % heads == 0
        d_val_head = C_val // heads

        # adaptive_avg_pool2d over the value sequence length commutes with the
        # position-wise value Linear and the head split -> apply it here, exactly.
        if L_val != L_enc:
            P = _adaptive_avg_pool_matrix(L_enc, L_val, val_t.dtype)
            val_t = jnp.einsum("ol,bld->bod", P, val_t)

        wqk = jnp.concatenate([wq_t, wk_t], axis=1)                          # (C_enc, 2C_enc)
        bqk = jnp.concatenate([bq_s, bk_z])[None, :]                         # (1, 2C_enc)
        wvo = jnp.concatenate([wv_t, wo_t], axis=0)                          # (2C_val, C_val)
        bvo = jnp.stack([bv, bo], axis=0)                                    # (2, C_val)

        kernel = partial(qkv_cross_kernel, heads=heads, d_head=d_head,
                         d_val_head=d_val_head, c_enc=C_enc, c_val=C_val)
        grid_spec = pltpu.PrefetchScalarGridSpec(
            num_scalar_prefetch=0,
            grid=(B,),
            in_specs=[
                pl.BlockSpec((1, L_enc, C_enc), lambda b: (b, 0, 0)),
                pl.BlockSpec((1, L_enc, C_val), lambda b: (b, 0, 0)),
                pl.BlockSpec((C_enc, 2 * C_enc), lambda b: (0, 0)),
                pl.BlockSpec((1, 2 * C_enc), lambda b: (0, 0)),
                pl.BlockSpec((2 * C_val, C_val), lambda b: (0, 0)),
                pl.BlockSpec((2, C_val), lambda b: (0, 0)),
            ],
            out_specs=pl.BlockSpec((1, L_enc, C_val), lambda b: (b, 0, 0)),
        )
        out_t = pl.pallas_call(
            kernel,
            out_shape=jax.ShapeDtypeStruct((B, L_enc, C_val), jnp.float32),
            grid_spec=grid_spec,
            compiler_params=cp,
        )(enc_t, val_t, wqk, bqk, wvo, bvo)

    return jnp.transpose(out_t, (0, 2, 1))                       # (B, C_val, L_enc)


def reference(pe_lin_encoding, pe_lin_skip, params, heads):
    """Plain-JAX transcription of the PyTorch forward."""
    B, C_enc, L_enc = pe_lin_encoding.shape
    d_head = C_enc // heads
    x = jnp.transpose(pe_lin_encoding, (0, 2, 1))
    q = x @ params["wq"].T + params["bq"]
    k = x @ params["wk"].T + params["bk"]
    xv = jnp.transpose(pe_lin_skip, (0, 2, 1)) if pe_lin_skip is not None else x
    v = xv @ params["wv"].T + params["bv"]

    def divide(t):
        b, l, c = t.shape
        return jnp.transpose(t.reshape(b, l, heads, c // heads), (0, 2, 1, 3))

    qh, kh, vh = divide(q), divide(k), divide(v)
    scores = jnp.einsum("bhqd,bhkd->bhqk", qh, kh) / math.sqrt(d_head)
    probs = jax.nn.softmax(scores, axis=-1)
    l_v = vh.shape[2]
    if l_v != L_enc:
        P = _adaptive_avg_pool_matrix(L_enc, l_v, vh.dtype)
        vh = jnp.einsum("ol,bhld->bhod", P, vh)
    av = jnp.einsum("bhqk,bhkd->bhqd", probs, vh)
    av = jnp.transpose(av, (0, 2, 1, 3)).reshape(B, L_enc, -1)
    out = av @ params["wo"].T + params["bo"]
    return jnp.transpose(out, (0, 2, 1))


if __name__ == "__main__":
    B, HEADS = 2, 2
    C_ENC, L_ENC = 32, 16
    C_SKIP, L_SKIP = 32, 24   # L_skip != L_enc exercises the adaptive-pool path

    key = jax.random.PRNGKey(0)
    ks = jax.random.split(key, 10)
    params = {
        "wq": 0.2 * jax.random.normal(ks[0], (C_ENC, C_ENC), jnp.float32),
        "bq": 0.1 * jax.random.normal(ks[1], (C_ENC,), jnp.float32),
        "wk": 0.2 * jax.random.normal(ks[2], (C_ENC, C_ENC), jnp.float32),
        "bk": 0.1 * jax.random.normal(ks[3], (C_ENC,), jnp.float32),
        "wv": 0.2 * jax.random.normal(ks[4], (C_SKIP, C_SKIP), jnp.float32),
        "bv": 0.1 * jax.random.normal(ks[5], (C_SKIP,), jnp.float32),
        "wo": 0.2 * jax.random.normal(ks[6], (C_SKIP, C_SKIP), jnp.float32),
        "bo": 0.1 * jax.random.normal(ks[7], (C_SKIP,), jnp.float32),
    }
    enc = jax.random.normal(ks[8], (B, C_ENC, L_ENC), jnp.float32)
    skip = jax.random.normal(ks[9], (B, C_SKIP, L_SKIP), jnp.float32)

    # Skip path (skip_channels given, pe_lin_skip given, L_skip != L_enc).
    out = jax.block_until_ready(qkv_attention(enc, skip, params, HEADS))
    ref = reference(enc, skip, params, HEADS)
    assert out.shape == (B, C_SKIP, L_ENC)
    assert jnp.allclose(out, ref, atol=1e-4, rtol=1e-4), "skip-path mismatch vs reference"

    # Self-attention path (skip_channels is None, pe_lin_skip is None).
    out2 = jax.block_until_ready(qkv_attention(enc, None, params, HEADS))
    ref2 = reference(enc, None, params, HEADS)
    assert out2.shape == (B, C_ENC, L_ENC)
    assert jnp.allclose(out2, ref2, atol=1e-4, rtol=1e-4), "self-path mismatch vs reference"

    print("KERNEL_OK")
</pallas_src>

<mosaic_0001>
module attributes {stable_mosaic.version = 11 : i64} {
  func.func @qkv_cross_kernel(%arg0: i32, %arg1: memref<1x16x32xf32, #tpu.memory_space<vmem>>, %arg2: memref<1x16x32xf32, #tpu.memory_space<vmem>>, %arg3: memref<32x64xf32, #tpu.memory_space<vmem>>, %arg4: memref<1x64xf32, #tpu.memory_space<vmem>>, %arg5: memref<64x32xf32, #tpu.memory_space<vmem>>, %arg6: memref<2x32xf32, #tpu.memory_space<vmem>>, %arg7: memref<1x16x32xf32, #tpu.memory_space<vmem>>) attributes {dimension_semantics = [#tpu.dimension_semantics<parallel>], iteration_bounds = array<i64: 2>, scalar_prefetch = 0 : i64, scratch_operands = 0 : i64, tpu.core_type = #tpu.core_type<tc>, window_params = [{transform_indices = @transform_0, window_bounds = array<i64: 1, 16, 32>}, {transform_indices = @transform_1, window_bounds = array<i64: 1, 16, 32>}, {pipeline_mode = #tpu.pipeline_mode<synchronous>, transform_indices = @transform_2, window_bounds = array<i64: 32, 64>}, {pipeline_mode = #tpu.pipeline_mode<synchronous>, transform_indices = @transform_3, window_bounds = array<i64: 1, 64>}, {pipeline_mode = #tpu.pipeline_mode<synchronous>, transform_indices = @transform_4, window_bounds = array<i64: 64, 32>}, {pipeline_mode = #tpu.pipeline_mode<synchronous>, transform_indices = @transform_5, window_bounds = array<i64: 2, 32>}, {transform_indices = @transform_6, window_bounds = array<i64: 1, 16, 32>}]} {
    %c0 = arith.constant 0 : index
    %c0_0 = arith.constant 0 : index
    %c0_1 = arith.constant 0 : index
    %0 = vector.load %arg1[%c0, %c0_0, %c0_1] : memref<1x16x32xf32, #tpu.memory_space<vmem>>, vector<1x16x32xf32>
    %1 = vector.shape_cast %0 : vector<1x16x32xf32> to vector<16x32xf32>
    %c0_2 = arith.constant 0 : index
    %c0_3 = arith.constant 0 : index
    %c0_4 = arith.constant 0 : index
    %2 = vector.load %arg2[%c0_2, %c0_3, %c0_4] : memref<1x16x32xf32, #tpu.memory_space<vmem>>, vector<1x16x32xf32>
    %3 = vector.shape_cast %2 : vector<1x16x32xf32> to vector<16x32xf32>
    %c0_5 = arith.constant 0 : index
    %c0_6 = arith.constant 0 : index
    %4 = vector.load %arg3[%c0_5, %c0_6] : memref<32x64xf32, #tpu.memory_space<vmem>>, vector<32x64xf32>
    %cst = arith.constant dense<0.000000e+00> : vector<16x64xf32>
    %5 = tpu.matmul %1, %4, %cst {dimension_numbers = #tpu.dot_dimension_numbers<[1], [0], [0], [1], [0, 0, 1, 1], [], []>} : vector<16x32xf32>, vector<32x64xf32>, vector<16x64xf32> -> vector<16x64xf32>
    %c0_7 = arith.constant 0 : index
    %c0_8 = arith.constant 0 : index
    %6 = vector.load %arg4[%c0_7, %c0_8] : memref<1x64xf32, #tpu.memory_space<vmem>>, vector<1x64xf32>
    %7 = vector.broadcast %6 : vector<1x64xf32> to vector<16x64xf32>
    %8 = arith.addf %5, %7 : vector<16x64xf32>
    %c0_9 = arith.constant 0 : index
    %c0_10 = arith.constant 0 : index
    %9 = vector.load %arg5[%c0_9, %c0_10] : memref<64x32xf32, #tpu.memory_space<vmem>>, vector<32x32xf32>
    %cst_11 = arith.constant dense<0.000000e+00> : vector<16x32xf32>
    %10 = tpu.matmul %3, %9, %cst_11 {dimension_numbers = #tpu.dot_dimension_numbers<[1], [0], [0], [1], [0, 0, 1, 1], [], []>} : vector<16x32xf32>, vector<32x32xf32>, vector<16x32xf32> -> vector<16x32xf32>
    %c0_12 = arith.constant 0 : index
    %c0_13 = arith.constant 0 : index
    %11 = vector.load %arg6[%c0_12, %c0_13] : memref<2x32xf32, #tpu.memory_space<vmem>>, vector<1x32xf32>
    %12 = vector.broadcast %11 : vector<1x32xf32> to vector<16x32xf32>
    %13 = arith.addf %10, %12 : vector<16x32xf32>
    %c32 = arith.constant 32 : index
    %c0_14 = arith.constant 0 : index
    %14 = vector.load %arg5[%c32, %c0_14] : memref<64x32xf32, #tpu.memory_space<vmem>>, vector<32x32xf32>
    %c1 = arith.constant 1 : index
    %c0_15 = arith.constant 0 : index
    %15 = vector.load %arg6[%c1, %c0_15] : memref<2x32xf32, #tpu.memory_space<vmem>>, vector<1x32xf32>
    %16 = vector.shape_cast %15 : vector<1x32xf32> to vector<1x32xf32>
    %17 = vector.broadcast %16 : vector<1x32xf32> to vector<16x32xf32>
    %18 = vector.extract_strided_slice %8 {offsets = [0, 0], sizes = [16, 16], strides = [1, 1]} : vector<16x64xf32> to vector<16x16xf32>
    %19 = vector.extract_strided_slice %8 {offsets = [0, 32], sizes = [16, 16], strides = [1, 1]} : vector<16x64xf32> to vector<16x16xf32>
    %20 = vector.extract_strided_slice %13 {offsets = [0, 0], sizes = [16, 16], strides = [1, 1]} : vector<16x32xf32> to vector<16x16xf32>
    "tpu.trace_start"() <{level = 10 : i32, message = "qd,kd->qk"}> : () -> ()
    %cst_16 = arith.constant dense<0.000000e+00> : vector<16x16xf32>
    %21 = tpu.matmul %18, %19, %cst_16 {dimension_numbers = #tpu.dot_dimension_numbers<[1], [1], [0], [0], [0, 0, 1, 0], [], []>} : vector<16x16xf32>, vector<16x16xf32>, vector<16x16xf32> -> vector<16x16xf32>
    "tpu.trace_stop"() : () -> ()
    %cst_17 = arith.constant dense<0xFF800000> : vector<16xf32>
    %22 = vector.multi_reduction <maximumf>, %21, %cst_17 [1] : vector<16x16xf32> to vector<16xf32>
    %23 = vector.shape_cast %22 : vector<16xf32> to vector<16x1xf32>
    %24 = vector.broadcast %23 : vector<16x1xf32> to vector<16x16xf32>
    %25 = arith.subf %21, %24 : vector<16x16xf32>
    %26 = math.exp %25 : vector<16x16xf32>
    %cst_18 = arith.constant dense<0.000000e+00> : vector<16xf32>
    %27 = vector.multi_reduction <add>, %26, %cst_18 [1] : vector<16x16xf32> to vector<16xf32>
    %28 = vector.shape_cast %27 : vector<16xf32> to vector<16x1xf32>
    %cst_19 = arith.constant 1.000000e+00 : f32
    %29 = vector.broadcast %cst_19 : f32 to vector<16x1xf32>
    %30 = arith.divf %29, %28 : vector<16x1xf32>
    %cst_20 = arith.constant dense<0.000000e+00> : vector<16x16xf32>
    %31 = tpu.matmul %26, %20, %cst_20 {dimension_numbers = #tpu.dot_dimension_numbers<[1], [0], [0], [1], [0, 0, 1, 1], [], []>} : vector<16x16xf32>, vector<16x16xf32>, vector<16x16xf32> -> vector<16x16xf32>
    %32 = vector.broadcast %30 : vector<16x1xf32> to vector<16x16xf32>
    %33 = arith.mulf %31, %32 : vector<16x16xf32>
    %34 = vector.extract_strided_slice %14 {offsets = [0, 0], sizes = [16, 32], strides = [1, 1]} : vector<32x32xf32> to vector<16x32xf32>
    %cst_21 = arith.constant dense<0.000000e+00> : vector<16x32xf32>
    %35 = tpu.matmul %33, %34, %cst_21 {dimension_numbers = #tpu.dot_dimension_numbers<[1], [0], [0], [1], [0, 0, 1, 1], [], []>} : vector<16x16xf32>, vector<16x32xf32>, vector<16x32xf32> -> vector<16x32xf32>
    %36 = arith.addf %17, %35 : vector<16x32xf32>
    %37 = vector.extract_strided_slice %8 {offsets = [0, 16], sizes = [16, 16], strides = [1, 1]} : vector<16x64xf32> to vector<16x16xf32>
    %38 = vector.extract_strided_slice %8 {offsets = [0, 48], sizes = [16, 16], strides = [1, 1]} : vector<16x64xf32> to vector<16x16xf32>
    %39 = vector.extract_strided_slice %13 {offsets = [0, 16], sizes = [16, 16], strides = [1, 1]} : vector<16x32xf32> to vector<16x16xf32>
    "tpu.trace_start"() <{level = 10 : i32, message = "qd,kd->qk"}> : () -> ()
    %cst_22 = arith.constant dense<0.000000e+00> : vector<16x16xf32>
    %40 = tpu.matmul %37, %38, %cst_22 {dimension_numbers = #tpu.dot_dimension_numbers<[1], [1], [0], [0], [0, 0, 1, 0], [], []>} : vector<16x16xf32>, vector<16x16xf32>, vector<16x16xf32> -> vector<16x16xf32>
    "tpu.trace_stop"() : () -> ()
    %cst_23 = arith.constant dense<0xFF800000> : vector<16xf32>
    %41 = vector.multi_reduction <maximumf>, %40, %cst_23 [1] : vector<16x16xf32> to vector<16xf32>
    %42 = vector.shape_cast %41 : vector<16xf32> to vector<16x1xf32>
    %43 = vector.broadcast %42 : vector<16x1xf32> to vector<16x16xf32>
    %44 = arith.subf %40, %43 : vector<16x16xf32>
    %45 = math.exp %44 : vector<16x16xf32>
    %cst_24 = arith.constant dense<0.000000e+00> : vector<16xf32>
    %46 = vector.multi_reduction <add>, %45, %cst_24 [1] : vector<16x16xf32> to vector<16xf32>
    %47 = vector.shape_cast %46 : vector<16xf32> to vector<16x1xf32>
    %cst_25 = arith.constant 1.000000e+00 : f32
    %48 = vector.broadcast %cst_25 : f32 to vector<16x1xf32>
    %49 = arith.divf %48, %47 : vector<16x1xf32>
    %cst_26 = arith.constant dense<0.000000e+00> : vector<16x16xf32>
    %50 = tpu.matmul %45, %39, %cst_26 {dimension_numbers = #tpu.dot_dimension_numbers<[1], [0], [0], [1], [0, 0, 1, 1], [], []>} : vector<16x16xf32>, vector<16x16xf32>, vector<16x16xf32> -> vector<16x16xf32>
    %51 = vector.broadcast %49 : vector<16x1xf32> to vector<16x16xf32>
    %52 = arith.mulf %50, %51 : vector<16x16xf32>
    %53 = vector.extract_strided_slice %14 {offsets = [16, 0], sizes = [16, 32], strides = [1, 1]} : vector<32x32xf32> to vector<16x32xf32>
    %cst_27 = arith.constant dense<0.000000e+00> : vector<16x32xf32>
    %54 = tpu.matmul %52, %53, %cst_27 {dimension_numbers = #tpu.dot_dimension_numbers<[1], [0], [0], [1], [0, 0, 1, 1], [], []>} : vector<16x16xf32>, vector<16x32xf32>, vector<16x32xf32> -> vector<16x32xf32>
    %55 = arith.addf %36, %54 : vector<16x32xf32>
    %c0_28 = arith.constant 0 : index
    %c0_29 = arith.constant 0 : index
    %c0_30 = arith.constant 0 : index
    %56 = vector.load %arg7[%c0_28, %c0_29, %c0_30] : memref<1x16x32xf32, #tpu.memory_space<vmem>>, vector<1x16x32xf32>
    %57 = vector.shape_cast %56 : vector<1x16x32xf32> to vector<16x32xf32>
    %58 = vector.shape_cast %55 : vector<16x32xf32> to vector<1x16x32xf32>
    tpu.vector_store %arg7[%c0_28, %c0_29, %c0_30], %58 {strides = array<i32>} : memref<1x16x32xf32, #tpu.memory_space<vmem>>, vector<1x16x32xf32>,
    return
  }
  func.func @transform_0(%arg0: i32) -> (i32, i32, i32) {
    %c0_i32 = arith.constant 0 : i32
    %c0_i32_0 = arith.constant 0 : i32
    %c0_i32_1 = arith.constant 0 : i32
    return %arg0, %c0_i32, %c0_i32_0 : i32, i32, i32
  }
  func.func @transform_1(%arg0: i32) -> (i32, i32, i32) {
    %c0_i32 = arith.constant 0 : i32
    %c0_i32_0 = arith.constant 0 : i32
    %c0_i32_1 = arith.constant 0 : i32
    return %arg0, %c0_i32, %c0_i32_0 : i32, i32, i32
  }
  func.func @transform_2(%arg0: i32) -> (i32, i32) {
    %c0_i32 = arith.constant 0 : i32
    %c0_i32_0 = arith.constant 0 : i32
    %c0_i32_1 = arith.constant 0 : i32
    return %c0_i32, %c0_i32_0 : i32, i32
  }
  func.func @transform_3(%arg0: i32) -> (i32, i32) {
    %c0_i32 = arith.constant 0 : i32
    %c0_i32_0 = arith.constant 0 : i32
    %c0_i32_1 = arith.constant 0 : i32
    return %c0_i32, %c0_i32_0 : i32, i32
  }
  func.func @transform_4(%arg0: i32) -> (i32, i32) {
    %c0_i32 = arith.constant 0 : i32
    %c0_i32_0 = arith.constant 0 : i32
    %c0_i32_1 = arith.constant 0 : i32
    return %c0_i32, %c0_i32_0 : i32, i32
  }
  func.func @transform_5(%arg0: i32) -> (i32, i32) {
    %c0_i32 = arith.constant 0 : i32
    %c0_i32_0 = arith.constant 0 : i32
    %c0_i32_1 = arith.constant 0 : i32
    return %c0_i32, %c0_i32_0 : i32, i32
  }
  func.func @transform_6(%arg0: i32) -> (i32, i32, i32) {
    %c0_i32 = arith.constant 0 : i32
    %c0_i32_0 = arith.constant 0 : i32
    %c0_i32_1 = arith.constant 0 : i32
    return %arg0, %c0_i32, %c0_i32_0 : i32, i32, i32
  }
}

</mosaic_0001>

<llo_original>
// kernel: tpu_custom_call.1
$region0: #{tpu_custom_call.1}
  #allocation0 [shape = 'u32[]', space=smem, size = 0x4, offset = 0x4, fixed_abs, tag = 'smem constant byte address 0x4 - core index']
  #allocation1 [shape = 'u32[72,128]{1,0:T(1,128)}', space=vmem, size = 0x9000, scoped, tag = 'internal scratch']
  %s0 = inlined_call_operand.vmem [shape: f32[2,16,32], index: 0, kind: input, shape index: {}]
  %s1 = inlined_call_operand.vmem [shape: f32[2,16,32], index: 1, kind: input, shape index: {}]
  %s2 = inlined_call_operand.vmem [shape: f32[32,64], index: 2, kind: input, shape index: {}]
  %s3 = inlined_call_operand.vmem [shape: f32[1,64], index: 3, kind: input, shape index: {}]
  %s4 = inlined_call_operand.vmem [shape: f32[64,32], index: 4, kind: input, shape index: {}]
  %s5 = inlined_call_operand.vmem [shape: f32[2,32], index: 5, kind: input, shape index: {}]
  %s6 = inlined_call_operand.hbm [shape: f32[2,16,32], index: 6, kind: output, shape index: {}]
  %s7 = sld [smem:[#allocation0]]
  $region57: #{tpu_custom_call.1} parent=0
    _
  %s9 = ssub.s32 1, %s7
  %s10 = scalar_select 0, %s9, %s7
  $region1: #{tpu_custom_call.1} parent=0
    #allocation2 [shape = 'u8[16384]{0}', space=vmem, size = 0x4000, scoped, tag = 'output window, operand 0']
    #allocation3 [shape = 's32[2]{0}', space=sflag, size = 0x8, scoped, tag = 'scoped memory for tpu_custom_call.1']
    %11 = vsyncpa [#allocation3], 0
    %s12 = scalar_lea.sflag [#allocation3], 1
    %13 = vsyncpa %s12, 0
    loop: start=0, step=1, limit=4
    $region2: #{tpu_custom_call.1} parent=1 // loop_pre_header
      _
    $region3: #{tpu_custom_call.1} parent=1 // loop_header
      %s15 = sphi 0, %s19
      %p16 = scmp.ge.s32.totalorder %s15, 4
      %s25 = sphi 0, %s27
      %s28 = sphi 0, %s25
      %s29 = sphi 0, %s28
      %s45 = sphi 0, %s29
      %s51 = sphi 0, %s53
      %s54 = sphi 0, %s51
      %s55 = sphi 0, %s54
      %s71 = sphi 0, %s55
      %s75 = sphi 0, %s75
      %s77 = sphi 0, %s75
      %s78 = sphi 0, %s77
      %s92 = sphi 0, %s78
      %s96 = sphi 0, %s96
      %s98 = sphi 0, %s96
      %s99 = sphi 0, %s98
      %s113 = sphi 0, %s99
      %s117 = sphi 0, %s117
      %s119 = sphi 0, %s117
      %s120 = sphi 0, %s119
      %s134 = sphi 0, %s120
      %s138 = sphi 0, %s138
      %s140 = sphi 0, %s138
      %s141 = sphi 0, %s140
      %s155 = sphi 0, %s141
      %s161 = sphi 0, %s163
      %s164 = sphi 0, %s161
      %s165 = sphi 0, %s164
      %s181 = sphi 0, %s165
    $region4: #{tpu_custom_call.1} parent=1 // loop_header_branch
      %18 = sbr.rel (%p16) target = $region8
    $region5: #{tpu_custom_call.1} parent=1 // loop_body
      %s20 = ssub.s32 %s15, 1
      %s21 = ssub.s32 %s15, 2
      %s22 = sadd.s32 %s15, 1
      %s23 = ssub.s32 %s15, %s22
      %p24 = scmp.eq.s32.totalorder %s23, 0
      %s26 = sadd.s32 %s25, 1
      %s27 = scalar_select %p24, %s25, %s26
      %p30 = pneg %p24
      %p31 = scmp.eq.s32.totalorder %s15, 1
      %p32 = por %p30, %p31
      %p33 = scmp.ne.s32.totalorder %s25, %s28
      %p34 = scmp.eq.s32.totalorder %s15, 0
      %p35 = por %p33, %p34
      %p36 = scmp.ne.s32.totalorder %s25, %s28
      %p37 = scmp.eq.s32.totalorder %s20, 1
      %p38 = por %p36, %p37
      %p39 = scmp.ne.s32.totalorder %s28, %s29
      %p40 = scmp.eq.s32.totalorder %s20, 0
      %p41 = por %p39, %p40
      %p42 = scmp.ne.s32.totalorder %s28, %s29
      %p43 = scmp.eq.s32.totalorder %s21, 1
      %p44 = por %p42, %p43
      %p46 = scmp.ne.s32.totalorder %s29, %s45
      %p47 = scmp.eq.s32.totalorder %s21, 0
      %p48 = por %p46, %p47
      %s49 = ssub.s32 %s15, %s22
      %p50 = scmp.eq.s32.totalorder %s49, 0
      %s52 = sadd.s32 %s51, 1
      %s53 = scalar_select %p50, %s51, %s52
      %p56 = pneg %p50
      %p57 = scmp.eq.s32.totalorder %s15, 1
      %p58 = por %p56, %p57
      %p59 = scmp.ne.s32.totalorder %s51, %s54
      %p60 = scmp.eq.s32.totalorder %s15, 0
      %p61 = por %p59, %p60
      %p62 = scmp.ne.s32.totalorder %s51, %s54
      %p63 = scmp.eq.s32.totalorder %s20, 1
      %p64 = por %p62, %p63
      %p65 = scmp.ne.s32.totalorder %s54, %s55
      %p66 = scmp.eq.s32.totalorder %s20, 0
      %p67 = por %p65, %p66
      %p68 = scmp.ne.s32.totalorder %s54, %s55
      %p69 = scmp.eq.s32.totalorder %s21, 1
      %p70 = por %p68, %p69
      %p72 = scmp.ne.s32.totalorder %s55, %s71
      %p73 = scmp.eq.s32.totalorder %s21, 0
      %p74 = por %p72, %p73
      %s76 = sadd.s32 %s75, 1
      %p79 = scmp.eq.s32.totalorder %s15, 1
      %p80 = scmp.ne.s32.totalorder %s75, %s77
      %p81 = scmp.eq.s32.totalorder %s15, 0
      %p82 = por %p80, %p81
      %p83 = scmp.ne.s32.totalorder %s75, %s77
      %p84 = scmp.eq.s32.totalorder %s20, 1
      %p85 = por %p83, %p84
      %p86 = scmp.ne.s32.totalorder %s77, %s78
      %p87 = scmp.eq.s32.totalorder %s20, 0
      %p88 = por %p86, %p87
      %p89 = scmp.ne.s32.totalorder %s77, %s78
      %p90 = scmp.eq.s32.totalorder %s21, 1
      %p91 = por %p89, %p90
      %p93 = scmp.ne.s32.totalorder %s78, %s92
      %p94 = scmp.eq.s32.totalorder %s21, 0
      %p95 = por %p93, %p94
      %s97 = sadd.s32 %s96, 1
      %p100 = scmp.eq.s32.totalorder %s15, 1
      %p101 = scmp.ne.s32.totalorder %s96, %s98
      %p102 = scmp.eq.s32.totalorder %s15, 0
      %p103 = por %p101, %p102
      %p104 = scmp.ne.s32.totalorder %s96, %s98
      %p105 = scmp.eq.s32.totalorder %s20, 1
      %p106 = por %p104, %p105
      %p107 = scmp.ne.s32.totalorder %s98, %s99
      %p108 = scmp.eq.s32.totalorder %s20, 0
      %p109 = por %p107, %p108
      %p110 = scmp.ne.s32.totalorder %s98, %s99
      %p111 = scmp.eq.s32.totalorder %s21, 1
      %p112 = por %p110, %p111
      %p114 = scmp.ne.s32.totalorder %s99, %s113
      %p115 = scmp.eq.s32.totalorder %s21, 0
      %p116 = por %p114, %p115
      %s118 = sadd.s32 %s117, 1
      %p121 = scmp.eq.s32.totalorder %s15, 1
      %p122 = scmp.ne.s32.totalorder %s117, %s119
      %p123 = scmp.eq.s32.totalorder %s15, 0
      %p124 = por %p122, %p123
      %p125 = scmp.ne.s32.totalorder %s117, %s119
      %p126 = scmp.eq.s32.totalorder %s20, 1
      %p127 = por %p125, %p126
      %p128 = scmp.ne.s32.totalorder %s119, %s120
      %p129 = scmp.eq.s32.totalorder %s20, 0
      %p130 = por %p128, %p129
      %p131 = scmp.ne.s32.totalorder %s119, %s120
      %p132 = scmp.eq.s32.totalorder %s21, 1
      %p133 = por %p131, %p132
      %p135 = scmp.ne.s32.totalorder %s120, %s134
      %p136 = scmp.eq.s32.totalorder %s21, 0
      %p137 = por %p135, %p136
      %s139 = sadd.s32 %s138, 1
      %p142 = scmp.eq.s32.totalorder %s15, 1
      %p143 = scmp.ne.s32.totalorder %s138, %s140
      %p144 = scmp.eq.s32.totalorder %s15, 0
      %p145 = por %p143, %p144
      %p146 = scmp.ne.s32.totalorder %s138, %s140
      %p147 = scmp.eq.s32.totalorder %s20, 1
      %p148 = por %p146, %p147
      %p149 = scmp.ne.s32.totalorder %s140, %s141
      %p150 = scmp.eq.s32.totalorder %s20, 0
      %p151 = por %p149, %p150
      %p152 = scmp.ne.s32.totalorder %s140, %s141
      %p153 = scmp.eq.s32.totalorder %s21, 1
      %p154 = por %p152, %p153
      %p156 = scmp.ne.s32.totalorder %s141, %s155
      %p157 = scmp.eq.s32.totalorder %s21, 0
      %p158 = por %p156, %p157
      %s159 = ssub.s32 %s15, %s22
      %p160 = scmp.eq.s32.totalorder %s159, 0
      %s162 = sadd.s32 %s161, 1
      %s163 = scalar_select %p160, %s161, %s162
      %p166 = pneg %p160
      %p167 = scmp.eq.s32.totalorder %s15, 1
      %p168 = por %p166, %p167
      %p169 = scmp.ne.s32.totalorder %s161, %s164
      %p170 = scmp.eq.s32.totalorder %s15, 0
      %p171 = por %p169, %p170
      %p172 = scmp.ne.s32.totalorder %s161, %s164
      %p173 = scmp.eq.s32.totalorder %s20, 1
      %p174 = por %p172, %p173
      %p175 = scmp.ne.s32.totalorder %s164, %s165
      %p176 = scmp.eq.s32.totalorder %s20, 0
      %p177 = por %p175, %p176
      %p178 = scmp.ne.s32.totalorder %s164, %s165
      %p179 = scmp.eq.s32.totalorder %s21, 1
      %p180 = por %p178, %p179
      %p182 = scmp.ne.s32.totalorder %s165, %s181
      %p183 = scmp.eq.s32.totalorder %s21, 0
      %p184 = por %p182, %p183
      %p185 = scmp.le.s32.totalorder 1, %s15
      %p186 = scmp.lt.s32.totalorder %s15, 3
      %p187 = pnand %p185, %p186
      %p188 = pneg %p187
      // Predicated region
      $region9: #{tpu_custom_call.1} parent=5 // pred_check
        _
      $region10: #{tpu_custom_call.1} parent=5 // pred_check_branch
        %190 = sbr.rel (%p187) target = $region12
      $region11: #{tpu_custom_call.1} parent=5 // pred_region
        %s191 = ssub.s32 %s15, 1
        // Predicated region
        $region13: #{tpu_custom_call.1} parent=11 // pred_check
          %p192 = pneg %p88
        $region14: #{tpu_custom_call.1} parent=11 // pred_check_branch
          %194 = sbr.rel (%p192) target = $region16
        $region15: #{tpu_custom_call.1} parent=11 // pred_region
          _
        $region16: #{tpu_custom_call.1} parent=11 // pred_fallthru
          _
        // Predicated region
        $region17: #{tpu_custom_call.1} parent=11 // pred_check
          %p195 = pneg %p109
        $region18: #{tpu_custom_call.1} parent=11 // pred_check_branch
          %197 = sbr.rel (%p195) target = $region20
        $region19: #{tpu_custom_call.1} parent=11 // pred_region
          _
        $region20: #{tpu_custom_call.1} parent=11 // pred_fallthru
          _
        // Predicated region
        $region21: #{tpu_custom_call.1} parent=11 // pred_check
          %p198 = pneg %p130
        $region22: #{tpu_custom_call.1} parent=11 // pred_check_branch
          %200 = sbr.rel (%p198) target = $region24
        $region23: #{tpu_custom_call.1} parent=11 // pred_region
          _
        $region24: #{tpu_custom_call.1} parent=11 // pred_fallthru
          _
        // Predicated region
        $region25: #{tpu_custom_call.1} parent=11 // pred_check
          %p201 = pneg %p151
        $region26: #{tpu_custom_call.1} parent=11 // pred_check_branch
          %203 = sbr.rel (%p201) target = $region28
        $region27: #{tpu_custom_call.1} parent=11 // pred_region
          _
        $region28: #{tpu_custom_call.1} parent=11 // pred_fallthru
          _
      $region12: #{tpu_custom_call.1} parent=5 // pred_fallthru
        _
      %p204 = scmp.lt.s32.totalorder %s15, 2
      // Predicated region
      $region29: #{tpu_custom_call.1} parent=5 // pred_check
        %p205 = pneg %p204
      $region30: #{tpu_custom_call.1} parent=5 // pred_check_branch
        %207 = sbr.rel (%p205) target = $region32
      $region31: #{tpu_custom_call.1} parent=5 // pred_region
        // Predicated region
        $region33: #{tpu_custom_call.1} parent=31 // pred_check
          %p208 = pneg %p35
        $region34: #{tpu_custom_call.1} parent=31 // pred_check_branch
          %210 = sbr.rel (%p208) target = $region36
        $region35: #{tpu_custom_call.1} parent=31 // pred_region
          %p211 = scmp.lt.s32.totalorder %s15, 1
          %s212 = scalar_select %p211, %s15, 1
          %s213 = smul.addr %s212, 2
          %s214 = smul.addr %s213, 8
          %s215 = scalar_lea.vmem %s0, %s214
        $region36: #{tpu_custom_call.1} parent=31 // pred_fallthru
          _
        // Predicated region
        $region37: #{tpu_custom_call.1} parent=31 // pred_check
          %p216 = pneg %p61
        $region38: #{tpu_custom_call.1} parent=31 // pred_check_branch
          %218 = sbr.rel (%p216) target = $region40
        $region39: #{tpu_custom_call.1} parent=31 // pred_region
          %p219 = scmp.lt.s32.totalorder %s15, 1
          %s220 = scalar_select %p219, %s15, 1
          %s221 = smul.addr %s220, 2
          %s222 = smul.addr %s221, 8
          %s223 = scalar_lea.vmem %s1, %s222
        $region40: #{tpu_custom_call.1} parent=31 // pred_fallthru
          _
      $region32: #{tpu_custom_call.1} parent=5 // pred_fallthru
        _
      %p224 = scmp.le.s32.totalorder 1, %s15
      %p225 = scmp.lt.s32.totalorder %s15, 3
      %p226 = pnand %p224, %p225
      %p227 = pneg %p226
      // Predicated region
      $region41: #{tpu_custom_call.1} parent=5 // pred_check
        _
      $region42: #{tpu_custom_call.1} parent=5 // pred_check_branch
        %229 = sbr.rel (%p226) target = $region44
      $region43: #{tpu_custom_call.1} parent=5 // pred_region
        %s230 = ssub.s32 %s15, 1
        %p231 = scmp.lt.s32.totalorder %s20, 1
        %s232 = scalar_select %p231, %s20, 1
        %s233 = smul.addr %s232, 2
        %s234 = smul.addr %s233, 8
        %s235 = scalar_lea.vmem %s0, %s234
        %p236 = pneg %p41
        %p237 = pneg %p38
        %p238 = scmp.lt.s32.totalorder %s20, 1
        %s239 = scalar_select %p238, %s20, 1
        %s240 = smul.addr %s239, 2
        %s241 = smul.addr %s240, 8
        %s242 = scalar_lea.vmem %s1, %s241
        %p243 = pneg %p67
        %p244 = pneg %p64
        %p245 = pneg %p88
        %p246 = pneg %p85
        %p247 = pneg %p109
        %p248 = pneg %p106
        %p249 = pneg %p130
        %p250 = pneg %p127
        %p251 = pneg %p151
        %p252 = pneg %p148
        %p253 = pneg %p177
        %p254 = pneg %p174
        %s255 = sand.u32 %s164, 1
        %s256 = scalar_lea.sflag [#allocation3], %s255
        %s257 = sand.u32 %s164, 1
        %s258 = smul.addr %s257, 16
        %s259 = scalar_lea.vmem [#allocation2], %s258
        %p260 = scmp.lt.s32.totalorder %s20, 1
        %s261 = scalar_select %p260, %s20, 1
        %s262 = smul.addr %s261, 2
        %s263 = smul.addr %s262, 8
        %s264 = scalar_lea.vmem %s0, %s263
        %p265 = scmp.lt.s32.totalorder %s20, 1
        %s266 = scalar_select %p265, %s20, 1
        %s267 = smul.addr %s266, 2
        %s268 = smul.addr %s267, 8
        %s269 = scalar_lea.vmem %s1, %s268
        %v270 = vld [vmem:[%s264] sm:$0xff]
        %v271 = vld [vmem:[%s264 + $0x8] sm:$0xff]
        %v272 = vld [vmem:[%s269] sm:$0xff]
        %v273 = vld [vmem:[%s269 + $0x8] sm:$0xff]
        %v274 = vld [vmem:[%s2] sm:$0xff]
        %v275 = vld [vmem:[%s2 + $0x8] sm:$0xff]
        %v276 = vld [vmem:[%s2 + $0x10] sm:$0xff]
        %v277 = vld [vmem:[%s2 + $0x18] sm:$0xff]
        %v278 = vld [vmem:[%s3] sm:$0x1]
        %v280 = vperm.slane %v278, 0
        %vm282 = vcmask 261120
        %v284 = vsel %vm282, %v270, 0
        %v287 = vsel %vm282, %v271, 0
        %289 = vmatpush.msra.mxu0 0.0
        %290 = vmatpush.msra.mxu0 0.0
        %291 = vmatpush.msra.mxu0 0.0
        %292 = vmatpush.msra.mxu0 0.0
        %293 = vmatpush.msra.mxu0 0.0
        %294 = vmatpush.msra.mxu0 0.0
        %295 = vmatpush.msra.mxu0 0.0
        %296 = vmatpush.msra.mxu0 0.0
        %297 = vmatpush.msra.mxu0 0.0
        %298 = vmatpush.msra.mxu0 0.0
        %299 = vmatpush.msra.mxu0 0.0
        %300 = vmatpush.msra.mxu0 0.0
        %301 = vmatpush.msra.mxu0 %v277
        %302 = vmatpush.msra.mxu0 %v276
        %303 = vmatpush.msra.mxu0 %v275
        %304 = vmatpush.msra.mxu0 %v274
        %305 = vmatmul.f32.gmra.mxu0 %v284
        %v306 = vpop.f32.mrf.mxu0
        %v307 = vadd.f32 %v280, %v306
        %308 = vmatmul.f32.gmra.mxu0 %v287
        %v309 = vpop.f32.mrf.mxu0
        %v310 = vadd.f32 %v280, %v309
        %311 = vdwg.mxu0
        %v312 = vld [vmem:[%s4] sm:$0xff]
        %v313 = vld [vmem:[%s4 + $0x8] sm:$0xff]
        %v314 = vld [vmem:[%s4 + $0x10] sm:$0xff]
        %v315 = vld [vmem:[%s4 + $0x18] sm:$0xff]
        %v316 = vld [vmem:[%s5] sm:$0x1]
        %v317 = vperm.slane %v316, 0
        %v319 = vsel %vm282, %v272, 0
        %v322 = vsel %vm282, %v273, 0
        %324 = vmatpush.msra.mxu0 0.0
        %325 = vmatpush.msra.mxu0 0.0
        %326 = vmatpush.msra.mxu0 0.0
        %327 = vmatpush.msra.mxu0 0.0
        %328 = vmatpush.msra.mxu0 0.0
        %329 = vmatpush.msra.mxu0 0.0
        %330 = vmatpush.msra.mxu0 0.0
        %331 = vmatpush.msra.mxu0 0.0
        %332 = vmatpush.msra.mxu0 0.0
        %333 = vmatpush.msra.mxu0 0.0
        %334 = vmatpush.msra.mxu0 0.0
        %335 = vmatpush.msra.mxu0 0.0
        %336 = vmatpush.msra.mxu0 %v315
        %337 = vmatpush.msra.mxu0 %v314
        %338 = vmatpush.msra.mxu0 %v313
        %339 = vmatpush.msra.mxu0 %v312
        %340 = vmatmul.f32.gmra.mxu0 %v319
        %v341 = vpop.f32.mrf.mxu0
        %v342 = vadd.f32 %v317, %v341
        %343 = vmatmul.f32.gmra.mxu0 %v322
        %v344 = vpop.f32.mrf.mxu0
        %v345 = vadd.f32 %v317, %v344
        %346 = vdwg.mxu0
        %v347 = vld [vmem:[%s4 + $0x20] sm:$0xff]
        %v348 = vld [vmem:[%s4 + $0x28] sm:$0xff]
        %v349 = vld [vmem:[%s4 + $0x30] sm:$0xff]
        %v350 = vld [vmem:[%s4 + $0x38] sm:$0xff]
        %v351 = vld [vmem:[%s5 + $0x1] sm:$0x1]
        %v352 = vperm.slane %v351, 0
        %355 = vrot.lane.b32.xlu0 %v307, 96
        %v356 = vpop.permute.xlu0 %355
        %357 = vrot.lane.b32.xlu0 %v310, 96
        %v358 = vpop.permute.xlu0 %357
        %vm359 = vcmask 130048
        %v360 = vsel %vm359, %v307, 0
        %v362 = vsel %vm359, %v310, 0
        %v364 = vsel %vm359, %v356, 0
        %v366 = vsel %vm359, %v358, 0
        %368 = vmatpush.xpose.msra.mxu0 0.0
        %369 = vmatpush.xpose.msra.mxu0 0.0
        %370 = vmatpush.xpose.msra.mxu0 0.0
        %371 = vmatpush.xpose.msra.mxu0 0.0
        %372 = vmatpush.xpose.msra.mxu0 0.0
        %373 = vmatpush.xpose.msra.mxu0 0.0
        %374 = vmatpush.xpose.msra.mxu0 0.0
        %375 = vmatpush.xpose.msra.mxu0 0.0
        %376 = vmatpush.xpose.msra.mxu0 0.0
        %377 = vmatpush.xpose.msra.mxu0 0.0
        %378 = vmatpush.xpose.msra.mxu0 0.0
        %379 = vmatpush.xpose.msra.mxu0 0.0
        %380 = vmatpush.xpose.msra.mxu0 0.0
        %381 = vmatpush.xpose.msra.mxu0 0.0
        %382 = vmatpush.xpose.msra.mxu0 %v366
        %383 = vmatpush.xpose.msra.mxu0 %v364
        %384 = vmatmul.f32.gmra.mxu0 %v360
        %v385 = vpop.f32.mrf.mxu0
        %v386 = vadd.f32 0.0, %v385
        %387 = vmatmul.f32.gmra.mxu0 %v362
        %v388 = vpop.f32.mrf.mxu0
        %v389 = vadd.f32 0.0, %v388
        %390 = vdwg.mxu0
        %v391 = vsel %vm359, %v386, -inf
        %392 = vmax.xlane.f32.xlu0 %v391
        %v393 = vpop.xlane.xlu0 %392
        %v394 = vsel %vm359, %v389, -inf
        %395 = vmax.xlane.f32.xlu0 %v394
        %v396 = vpop.xlane.xlu0 %395
        %v397 = vsub.f32 %v386, %v393
        %v398 = vsub.f32 %v389, %v396
        %v399 = vmul.f32 %v397, 1.442695
        %v400 = vpow.pop %v399
        %v401 = vmul.f32 %v398, 1.442695
        %v402 = vpow.pop %v401
        %v403 = vsel %vm359, %v400, 0.0
        %404 = vadd.xlane.f32.xlu0 %v403
        %v405 = vpop.xlane.xlu0 %404
        %v406 = vsel %vm359, %v402, 0.0
        %407 = vadd.xlane.f32.xlu0 %v406
        %v408 = vpop.xlane.xlu0 %407
        %v409 = vrcp.pop %v405
        %v410 = vmul.f32 %v405, %v409
        %v411 = vsub.f32 1.0, %v410
        %v412 = vmul.f32 %v409, %v411
        %v413 = vadd.f32 %v409, %v412
        %vm414 = vweird.f32 %v405
        %vm415 = vweird.f32 %v409
        %vm416 = vmor %vm414, %vm415
        %v417 = vsel %vm416, %v409, %v413
        %v418 = vand.u32 2147483647, %v405
        %vm419 = vcmp.eq.f32.partialorder %v418, 8.507059e+37
        %v420 = vand.u32 %v405, 2147483648
        %v421 = vor.u32 1.1754944e-38, %v420
        %v422 = vsel %vm419, %v421, %v417
        %v423 = vmul.f32 1.0, %v422
        %v424 = vrcp.pop %v408
        %v425 = vmul.f32 %v408, %v424
        %v426 = vsub.f32 1.0, %v425
        %v427 = vmul.f32 %v424, %v426
        %v428 = vadd.f32 %v424, %v427
        %vm429 = vweird.f32 %v408
        %vm430 = vweird.f32 %v424
        %vm431 = vmor %vm429, %vm430
        %v432 = vsel %vm431, %v424, %v428
        %v433 = vand.u32 2147483647, %v408
        %vm434 = vcmp.eq.f32.partialorder %v433, 8.507059e+37
        %v435 = vand.u32 %v408, 2147483648
        %v436 = vor.u32 1.1754944e-38, %v435
        %v437 = vsel %vm434, %v436, %v432
        %v438 = vmul.f32 1.0, %v437
        %v440 = vsel %vm359, %v400, 0
        %v443 = vsel %vm359, %v402, 0
        %445 = vmatpush.msra.mxu0 0.0
        %446 = vmatpush.msra.mxu0 0.0
        %447 = vmatpush.msra.mxu0 0.0
        %448 = vmatpush.msra.mxu0 0.0
        %449 = vmatpush.msra.mxu0 0.0
        %450 = vmatpush.msra.mxu0 0.0
        %451 = vmatpush.msra.mxu0 0.0
        %452 = vmatpush.msra.mxu0 0.0
        %453 = vmatpush.msra.mxu0 0.0
        %454 = vmatpush.msra.mxu0 0.0
        %455 = vmatpush.msra.mxu0 0.0
        %456 = vmatpush.msra.mxu0 0.0
        %457 = vmatpush.msra.mxu0 0.0
        %458 = vmatpush.msra.mxu0 0.0
        %459 = vmatpush.msra.mxu0 %v345
        %460 = vmatpush.msra.mxu0 %v342
        %461 = vmatmul.f32.gmra.mxu0 %v440
        %v462 = vpop.f32.mrf.mxu0
        %v463 = vadd.f32 0.0, %v462
        %464 = vmatmul.f32.gmra.mxu0 %v443
        %v465 = vpop.f32.mrf.mxu0
        %v466 = vadd.f32 0.0, %v465
        %467 = vdwg.mxu0
        %v468 = vmul.f32 %v463, %v423
        %v469 = vmul.f32 %v466, %v438
        %v471 = vsel %vm359, %v468, 0
        %v474 = vsel %vm359, %v469, 0
        %476 = vmatpush.msra.mxu0 0.0
        %477 = vmatpush.msra.mxu0 0.0
        %478 = vmatpush.msra.mxu0 0.0
        %479 = vmatpush.msra.mxu0 0.0
        %480 = vmatpush.msra.mxu0 0.0
        %481 = vmatpush.msra.mxu0 0.0
        %482 = vmatpush.msra.mxu0 0.0
        %483 = vmatpush.msra.mxu0 0.0
        %484 = vmatpush.msra.mxu0 0.0
        %485 = vmatpush.msra.mxu0 0.0
        %486 = vmatpush.msra.mxu0 0.0
        %487 = vmatpush.msra.mxu0 0.0
        %488 = vmatpush.msra.mxu0 0.0
        %489 = vmatpush.msra.mxu0 0.0
        %490 = vmatpush.msra.mxu0 %v348
        %491 = vmatpush.msra.mxu0 %v347
        %492 = vmatmul.f32.gmra.mxu0 %v471
        %v493 = vpop.f32.mrf.mxu0
        %v494 = vadd.f32 0.0, %v493
        %495 = vmatmul.f32.gmra.mxu0 %v474
        %v496 = vpop.f32.mrf.mxu0
        %v497 = vadd.f32 0.0, %v496
        %498 = vdwg.mxu0
        %v499 = vadd.f32 %v352, %v494
        %v500 = vadd.f32 %v352, %v497
        %501 = vrot.lane.b32.xlu0 %v307, 112
        %v502 = vpop.permute.xlu0 %501
        %503 = vrot.lane.b32.xlu0 %v310, 112
        %v504 = vpop.permute.xlu0 %503
        %505 = vrot.lane.b32.xlu0 %v307, 80
        %v506 = vpop.permute.xlu0 %505
        %507 = vrot.lane.b32.xlu0 %v310, 80
        %v508 = vpop.permute.xlu0 %507
        %v509 = vsel %vm359, %v502, 0
        %v511 = vsel %vm359, %v504, 0
        %v513 = vsel %vm359, %v506, 0
        %v515 = vsel %vm359, %v508, 0
        %517 = vmatpush.xpose.msra.mxu0 0.0
        %518 = vmatpush.xpose.msra.mxu0 0.0
        %519 = vmatpush.xpose.msra.mxu0 0.0
        %520 = vmatpush.xpose.msra.mxu0 0.0
        %521 = vmatpush.xpose.msra.mxu0 0.0
        %522 = vmatpush.xpose.msra.mxu0 0.0
        %523 = vmatpush.xpose.msra.mxu0 0.0
        %524 = vmatpush.xpose.msra.mxu0 0.0
        %525 = vmatpush.xpose.msra.mxu0 0.0
        %526 = vmatpush.xpose.msra.mxu0 0.0
        %527 = vmatpush.xpose.msra.mxu0 0.0
        %528 = vmatpush.xpose.msra.mxu0 0.0
        %529 = vmatpush.xpose.msra.mxu0 0.0
        %530 = vmatpush.xpose.msra.mxu0 0.0
        %531 = vmatpush.xpose.msra.mxu0 %v515
        %532 = vmatpush.xpose.msra.mxu0 %v513
        %533 = vmatmul.f32.gmra.mxu0 %v509
        %v534 = vpop.f32.mrf.mxu0
        %v535 = vadd.f32 0.0, %v534
        %536 = vmatmul.f32.gmra.mxu0 %v511
        %v537 = vpop.f32.mrf.mxu0
        %v538 = vadd.f32 0.0, %v537
        %539 = vdwg.mxu0
        %v540 = vsel %vm359, %v535, -inf
        %541 = vmax.xlane.f32.xlu0 %v540
        %v542 = vpop.xlane.xlu0 %541
        %v543 = vsel %vm359, %v538, -inf
        %544 = vmax.xlane.f32.xlu0 %v543
        %v545 = vpop.xlane.xlu0 %544
        %v546 = vsub.f32 %v535, %v542
        %v547 = vsub.f32 %v538, %v545
        %v548 = vmul.f32 %v546, 1.442695
        %v549 = vpow.pop %v548
        %v550 = vmul.f32 %v547, 1.442695
        %v551 = vpow.pop %v550
        %v552 = vsel %vm359, %v549, 0.0
        %553 = vadd.xlane.f32.xlu0 %v552
        %v554 = vpop.xlane.xlu0 %553
        %v555 = vsel %vm359, %v551, 0.0
        %556 = vadd.xlane.f32.xlu0 %v555
        %v557 = vpop.xlane.xlu0 %556
        %v558 = vrcp.pop %v554
        %v559 = vmul.f32 %v554, %v558
        %v560 = vsub.f32 1.0, %v559
        %v561 = vmul.f32 %v558, %v560
        %v562 = vadd.f32 %v558, %v561
        %vm563 = vweird.f32 %v554
        %vm564 = vweird.f32 %v558
        %vm565 = vmor %vm563, %vm564
        %v566 = vsel %vm565, %v558, %v562
        %v567 = vand.u32 2147483647, %v554
        %vm568 = vcmp.eq.f32.partialorder %v567, 8.507059e+37
        %v569 = vand.u32 %v554, 2147483648
        %v570 = vor.u32 1.1754944e-38, %v569
        %v571 = vsel %vm568, %v570, %v566
        %v572 = vmul.f32 1.0, %v571
        %v573 = vrcp.pop %v557
        %v574 = vmul.f32 %v557, %v573
        %v575 = vsub.f32 1.0, %v574
        %v576 = vmul.f32 %v573, %v575
        %v577 = vadd.f32 %v573, %v576
        %vm578 = vweird.f32 %v557
        %vm579 = vweird.f32 %v573
        %vm580 = vmor %vm578, %vm579
        %v581 = vsel %vm580, %v573, %v577
        %v582 = vand.u32 2147483647, %v557
        %vm583 = vcmp.eq.f32.partialorder %v582, 8.507059e+37
        %v584 = vand.u32 %v557, 2147483648
        %v585 = vor.u32 1.1754944e-38, %v584
        %v586 = vsel %vm583, %v585, %v581
        %v587 = vmul.f32 1.0, %v586
        %590 = vrot.lane.b32.xlu0 %v342, 112
        %v591 = vpop.permute.xlu0 %590
        %592 = vrot.lane.b32.xlu0 %v345, 112
        %v593 = vpop.permute.xlu0 %592
        %v597 = vsel %vm359, %v549, 0
        %v600 = vsel %vm359, %v551, 0
        %602 = vmatpush.msra.mxu0 0.0
        %603 = vmatpush.msra.mxu0 0.0
        %604 = vmatpush.msra.mxu0 0.0
        %605 = vmatpush.msra.mxu0 0.0
        %606 = vmatpush.msra.mxu0 0.0
        %607 = vmatpush.msra.mxu0 0.0
        %608 = vmatpush.msra.mxu0 0.0
        %609 = vmatpush.msra.mxu0 0.0
        %610 = vmatpush.msra.mxu0 0.0
        %611 = vmatpush.msra.mxu0 0.0
        %612 = vmatpush.msra.mxu0 0.0
        %613 = vmatpush.msra.mxu0 0.0
        %614 = vmatpush.msra.mxu0 0.0
        %615 = vmatpush.msra.mxu0 0.0
        %616 = vmatpush.msra.mxu0 %v593
        %617 = vmatpush.msra.mxu0 %v591
        %618 = vmatmul.f32.gmra.mxu0 %v597
        %v619 = vpop.f32.mrf.mxu0
        %v620 = vadd.f32 0.0, %v619
        %621 = vmatmul.f32.gmra.mxu0 %v600
        %v622 = vpop.f32.mrf.mxu0
        %v623 = vadd.f32 0.0, %v622
        %624 = vdwg.mxu0
        %v625 = vmul.f32 %v620, %v572
        %v626 = vmul.f32 %v623, %v587
        %v628 = vsel %vm359, %v625, 0
        %v631 = vsel %vm359, %v626, 0
        %633 = vmatpush.msra.mxu0 0.0
        %634 = vmatpush.msra.mxu0 0.0
        %635 = vmatpush.msra.mxu0 0.0
        %636 = vmatpush.msra.mxu0 0.0
        %637 = vmatpush.msra.mxu0 0.0
        %638 = vmatpush.msra.mxu0 0.0
        %639 = vmatpush.msra.mxu0 0.0
        %640 = vmatpush.msra.mxu0 0.0
        %641 = vmatpush.msra.mxu0 0.0
        %642 = vmatpush.msra.mxu0 0.0
        %643 = vmatpush.msra.mxu0 0.0
        %644 = vmatpush.msra.mxu0 0.0
        %645 = vmatpush.msra.mxu0 0.0
        %646 = vmatpush.msra.mxu0 0.0
        %647 = vmatpush.msra.mxu0 %v350
        %648 = vmatpush.msra.mxu0 %v349
        %649 = vmatmul.f32.gmra.mxu0 %v628
        %v650 = vpop.f32.mrf.mxu0
        %v651 = vadd.f32 0.0, %v650
        %652 = vmatmul.f32.gmra.mxu0 %v631
        %v653 = vpop.f32.mrf.mxu0
        %v654 = vadd.f32 0.0, %v653
        %655 = vdwg.mxu0
        %v656 = vadd.f32 %v499, %v651
        %v657 = vadd.f32 %v500, %v654
        %658 = vst.msk [vmem:[%s259] sm:$0xff] %vm282, %v656
        %659 = vst.msk [vmem:[%s259 + $0x8] sm:$0xff] %vm282, %v657
        %s660 = sand.u32 %s164, 1
        %s661 = scalar_lea.sflag [#allocation3], %s660
        %s662 = sand.u32 %s164, 1
        %s663 = smul.addr %s662, 16
        %s664 = scalar_lea.vmem [#allocation2], %s663
        // Predicated region
        $region45: #{tpu_custom_call.1} parent=43 // pred_check
          %p665 = pneg %p174
        $region46: #{tpu_custom_call.1} parent=43 // pred_check_branch
          %667 = sbr.rel (%p665) target = $region48
        $region47: #{tpu_custom_call.1} parent=43 // pred_region
          %669 = vsyncadd %s661, 0
          %s670 = smul.addr %s20, 2
          %s671 = smul.addr %s670, 8
          %s672 = scalar_lea.hbm %s6, %s671
          %s673 = sshll.u32 %s664, 4
          %s674 = int_to_ptr.vmem [resolvable:$true] %s673
          %s675 = sshll.u32 %s672, 4
          %s676 = int_to_ptr.hbm [resolvable:$true] %s675
          %681 = dma.vmem_to_hbm [thread:$0]  %s674, 256, %s676, %s661, 128, 128, 8
        $region48: #{tpu_custom_call.1} parent=43 // pred_fallthru
          _
      $region44: #{tpu_custom_call.1} parent=5 // pred_fallthru
        _
      %p682 = scmp.le.s32.totalorder 2, %s15
      // Predicated region
      $region49: #{tpu_custom_call.1} parent=5 // pred_check
        %p683 = pneg %p682
      $region50: #{tpu_custom_call.1} parent=5 // pred_check_branch
        %685 = sbr.rel (%p683) target = $region52
      $region51: #{tpu_custom_call.1} parent=5 // pred_region
        %s686 = ssub.s32 %s15, 2
        // Predicated region
        $region53: #{tpu_custom_call.1} parent=51 // pred_check
          %p687 = pneg %p180
        $region54: #{tpu_custom_call.1} parent=51 // pred_check_branch
          %689 = sbr.rel (%p687) target = $region56
        $region55: #{tpu_custom_call.1} parent=51 // pred_region
          %s690 = sand.u32 %s165, 1
          %s691 = scalar_lea.sflag [#allocation3], %s690
          %s692 = sand.u32 %s165, 1
          %s693 = smul.addr %s692, 16
          %s694 = scalar_lea.vmem [#allocation2], %s693
          %696 = dma.done %s691, 256
        $region56: #{tpu_custom_call.1} parent=51 // pred_fallthru
          _
      $region52: #{tpu_custom_call.1} parent=5 // pred_fallthru
        _
    $region6: #{tpu_custom_call.1} parent=1 // loop_footer
      %s19 = sadd.s32 1, %s15
    $region7: #{tpu_custom_call.1} parent=1 // loop_footer_branch
      %14 = sbr.rel target = $region3
    $region8: #{tpu_custom_call.1} parent=1 // loop_exit
      _
    %697 = vsyncpa [#allocation3], 1
    %s698 = scalar_lea.sflag [#allocation3], 1
    %699 = vsyncpa %s698, 1

</llo_original>
